<compile_context>
chip_gen: v7x
topology: tpu7x:2x2x1
jax: 0.10.0
libtpu: 0.0.40
codegen_flags: <defaults>
</compile_context>

<pallas_src>
import jax
import jax.numpy as jnp
from jax.experimental import pallas as pl
from jax.experimental.pallas import tpu as pltpu


def _round_up(n, m):
    return ((n + m - 1) // m) * m


def _generator_kernel(z_ref, y_ref, w1z_ref, w1y_ref, b1_ref, w2_ref, b2_ref,
                      o_ref):
    # z_ref : (TM, z_dim)  f32/bf16     y_ref : (TM, y_dim)  f32/bf16
    # w1z_ref: (z_dim, h_dim) bf16      w1y_ref: (y_dim, h_dim) bf16
    # b1_ref : (1, h_dim) f32
    # w2_ref : (h_dim, x_dim) bf16      b2_ref : (1, x_dim) f32
    # o_ref  : (TM, x_dim) f32
    z = z_ref[...].astype(jnp.bfloat16)
    y = y_ref[...].astype(jnp.bfloat16)

    # fc1: split-K contraction replaces torch.cat([z, y], dim=1) @ W1^T
    h = (jnp.dot(z, w1z_ref[...], preferred_element_type=jnp.float32)
         + jnp.dot(y, w1y_ref[...], preferred_element_type=jnp.float32)
         + b1_ref[...])
    h = jnp.maximum(h, 0.0)                                   # ReLU (f32, VPU)

    # fc2 (+ sigmoid), f32 accumulation; store exactly x_dim columns.
    logits = jnp.dot(h.astype(jnp.bfloat16), w2_ref[...],
                     preferred_element_type=jnp.float32) + b2_ref[...]
    o_ref[...] = jax.nn.sigmoid(logits).astype(o_ref.dtype)


def prepare_generator_params(params, z_dim):
    """One-time weight prep (hoisted off the per-call path).

    Splits fc1's weight into its z-rows and y-rows and casts the matmul
    operands to bf16 so they live bf16-resident in HBM.
    """
    w1, b1, w2, b2 = params          # w1: (z_dim+y_dim, h), w2: (h, x)
    w1z = w1[:z_dim].astype(jnp.bfloat16)
    w1y = w1[z_dim:].astype(jnp.bfloat16)
    b1 = b1.reshape(1, -1).astype(jnp.float32)
    b2 = b2.reshape(1, -1).astype(jnp.float32)
    return (w1z, w1y, b1, w2.astype(jnp.bfloat16), b2)


def generator_forward(z, y, prepared_params, *, tm=2048):
    """Forward pass matching Generator.forward(z, y). z/y may be f32 or bf16."""
    w1z, w1y, b1, w2, b2 = prepared_params
    B, z_dim = z.shape
    y_dim = y.shape[1]
    h_dim = w1z.shape[1]
    x_dim = w2.shape[1]

    # Batch tile: as large as reasonable (HBM-bound kernel, per-step overhead
    # amortization), multiple of 16 (bf16 sublane packing).
    TM = min(tm, _round_up(B, 16))
    # v7x megacore: keep >= 2 grid steps for large batches so both TCs work.
    if B >= 1024 and TM >= B:
        TM = max(16, _round_up(pl.cdiv(B, 2), 16))
    grid = (pl.cdiv(B, TM),)   # trailing partial block handled by Pallas

    out = pl.pallas_call(
        _generator_kernel,
        out_shape=jax.ShapeDtypeStruct((B, x_dim), jnp.float32),
        grid=grid,
        in_specs=[
            pl.BlockSpec((TM, z_dim), lambda i: (i, 0)),      # z tile
            pl.BlockSpec((TM, y_dim), lambda i: (i, 0)),      # y tile
            pl.BlockSpec((z_dim, h_dim), lambda i: (0, 0)),   # W1[:z_dim]
            pl.BlockSpec((y_dim, h_dim), lambda i: (0, 0)),   # W1[z_dim:]
            pl.BlockSpec((1, h_dim), lambda i: (0, 0)),       # b1
            pl.BlockSpec((h_dim, x_dim), lambda i: (0, 0)),   # W2
            pl.BlockSpec((1, x_dim), lambda i: (0, 0)),       # b2
        ],
        out_specs=pl.BlockSpec((TM, x_dim), lambda i: (i, 0)),
        compiler_params=pltpu.CompilerParams(
            dimension_semantics=("parallel",),
            # Large batch tiles need more than v5e's 16 MiB scoped default;
            # 48 MiB is safe on v5e/v6e (128 MiB phys) and v7x (64 MiB phys).
            vmem_limit_bytes=48 * 1024 * 1024),
    )(z, y, w1z, w1y, b1, w2, b2)

    return out


def init_generator_params(key, z_dim, h_dim, x_dim, y_dim):
    """Xavier-normal weights, zero biases (matches xavier_init)."""
    k1, k2 = jax.random.split(key)
    in1 = z_dim + y_dim
    std1 = (2.0 / (in1 + h_dim)) ** 0.5
    std2 = (2.0 / (h_dim + x_dim)) ** 0.5
    w1 = jax.random.normal(k1, (in1, h_dim), jnp.float32) * std1    # fc1.weight^T
    b1 = jnp.zeros((1, h_dim), jnp.float32)                         # fc1.bias
    w2 = jax.random.normal(k2, (h_dim, x_dim), jnp.float32) * std2  # fc2.weight^T
    b2 = jnp.zeros((1, x_dim), jnp.float32)                         # fc2.bias
    return (w1, b1, w2, b2)


def _reference_f32(z, y, params):
    w1, b1, w2, b2 = params
    x = jnp.concatenate([z.astype(jnp.float32), y.astype(jnp.float32)], axis=1)
    return jax.nn.sigmoid(jnp.maximum(x @ w1 + b1, 0.0) @ w2 + b2)


def _reference_bf16(z, y, params):
    """Same numerics as the kernel: bf16 operands, f32 accumulation."""
    w1, b1, w2, b2 = params
    x = jnp.concatenate([z, y], axis=1).astype(jnp.bfloat16)
    h = jnp.maximum(
        jnp.dot(x, w1.astype(jnp.bfloat16),
                preferred_element_type=jnp.float32) + b1, 0.0)
    return jax.nn.sigmoid(
        jnp.dot(h.astype(jnp.bfloat16), w2.astype(jnp.bfloat16),
                preferred_element_type=jnp.float32) + b2)


if __name__ == "__main__":
    z_dim, h_dim, x_dim, y_dim = 32, 128, 64, 10

    key = jax.random.PRNGKey(0)
    kz, ky, kp = jax.random.split(key, 3)
    params = init_generator_params(kp, z_dim, h_dim, x_dim, y_dim)
    prepared = prepare_generator_params(params, z_dim)   # one-time weight prep

    # Small shape consistent with the module (single grid step).
    batch = 8
    z = jax.random.normal(kz, (batch, z_dim), jnp.float32)
    labels = jax.random.randint(ky, (batch,), 0, y_dim)
    y = jax.nn.one_hot(labels, y_dim, dtype=jnp.float32)

    out = jax.block_until_ready(generator_forward(z, y, prepared))
    assert out.shape == (batch, x_dim)
    assert out.dtype == jnp.float32
    assert jnp.allclose(out, _reference_bf16(z, y, params), atol=2e-3), \
        "mismatch vs bf16 reference"
    assert jnp.allclose(out, _reference_f32(z, y, params), atol=3e-2), \
        "mismatch vs f32 reference"

    # Non-divisible batch: exercises the trailing partial block (no host pad,
    # no post-kernel crop).
    batch2 = 300
    kz2, ky2 = jax.random.split(jax.random.PRNGKey(1))
    z2 = jax.random.normal(kz2, (batch2, z_dim), jnp.float32)
    y2 = jax.nn.one_hot(
        jax.random.randint(ky2, (batch2,), 0, y_dim), y_dim, dtype=jnp.float32)
    out2 = jax.block_until_ready(generator_forward(z2, y2, prepared))
    assert out2.shape == (batch2, x_dim)
    assert jnp.allclose(out2, _reference_bf16(z2, y2, params), atol=2e-3), \
        "mismatch vs bf16 reference (partial trailing block)"

    # bf16 activations path (producer emits bf16; kernel consumes directly).
    batch3 = 512
    kz3, ky3 = jax.random.split(jax.random.PRNGKey(2))
    z3 = jax.random.normal(kz3, (batch3, z_dim), jnp.bfloat16)
    y3 = jax.nn.one_hot(
        jax.random.randint(ky3, (batch3,), 0, y_dim), y_dim, dtype=jnp.bfloat16)
    out3 = jax.block_until_ready(generator_forward(z3, y3, prepared))
    assert out3.shape == (batch3, x_dim)
    assert jnp.allclose(out3, _reference_bf16(z3, y3, params), atol=2e-3), \
        "mismatch vs bf16 reference (bf16 inputs)"

    print("KERNEL_OK")
</pallas_src>

<mosaic_0001>
module attributes {stable_mosaic.version = 11 : i64} {
  func.func @_generator_kernel(%arg0: i32, %arg1: memref<16x32xf32, #tpu.memory_space<vmem>>, %arg2: memref<16x10xf32, #tpu.memory_space<vmem>>, %arg3: memref<32x128xbf16, #tpu.memory_space<vmem>>, %arg4: memref<10x128xbf16, #tpu.memory_space<vmem>>, %arg5: memref<1x128xf32, #tpu.memory_space<vmem>>, %arg6: memref<128x64xbf16, #tpu.memory_space<vmem>>, %arg7: memref<1x64xf32, #tpu.memory_space<vmem>>, %arg8: memref<16x64xf32, #tpu.memory_space<vmem>>) attributes {dimension_semantics = [#tpu.dimension_semantics<parallel>], iteration_bounds = array<i64: 1>, scalar_prefetch = 0 : i64, scratch_operands = 0 : i64, tpu.core_type = #tpu.core_type<tc>, window_params = [{transform_indices = @transform_0, window_bounds = array<i64: 16, 32>}, {transform_indices = @transform_1, window_bounds = array<i64: 16, 10>}, {pipeline_mode = #tpu.pipeline_mode<synchronous>, transform_indices = @transform_2, window_bounds = array<i64: 32, 128>}, {pipeline_mode = #tpu.pipeline_mode<synchronous>, transform_indices = @transform_3, window_bounds = array<i64: 10, 128>}, {pipeline_mode = #tpu.pipeline_mode<synchronous>, transform_indices = @transform_4, window_bounds = array<i64: 1, 128>}, {pipeline_mode = #tpu.pipeline_mode<synchronous>, transform_indices = @transform_5, window_bounds = array<i64: 128, 64>}, {pipeline_mode = #tpu.pipeline_mode<synchronous>, transform_indices = @transform_6, window_bounds = array<i64: 1, 64>}, {transform_indices = @transform_7, window_bounds = array<i64: 16, 64>}]} {
    %c0 = arith.constant 0 : index
    %c0_0 = arith.constant 0 : index
    %0 = vector.load %arg1[%c0, %c0_0] : memref<16x32xf32, #tpu.memory_space<vmem>>, vector<16x32xf32>
    %1 = arith.truncf %0 : vector<16x32xf32> to vector<16x32xbf16>
    %c0_1 = arith.constant 0 : index
    %c0_2 = arith.constant 0 : index
    %2 = vector.load %arg2[%c0_1, %c0_2] : memref<16x10xf32, #tpu.memory_space<vmem>>, vector<16x10xf32>
    %3 = arith.truncf %2 : vector<16x10xf32> to vector<16x10xbf16>
    %c0_3 = arith.constant 0 : index
    %c0_4 = arith.constant 0 : index
    %4 = vector.load %arg3[%c0_3, %c0_4] : memref<32x128xbf16, #tpu.memory_space<vmem>>, vector<32x128xbf16>
    %cst = arith.constant dense<0.000000e+00> : vector<16x128xf32>
    %5 = tpu.matmul %1, %4, %cst {dimension_numbers = #tpu.dot_dimension_numbers<[1], [0], [0], [1], [0, 0, 1, 1], [], []>} : vector<16x32xbf16>, vector<32x128xbf16>, vector<16x128xf32> -> vector<16x128xf32>
    %c0_5 = arith.constant 0 : index
    %c0_6 = arith.constant 0 : index
    %6 = vector.load %arg4[%c0_5, %c0_6] : memref<10x128xbf16, #tpu.memory_space<vmem>>, vector<10x128xbf16>
    %cst_7 = arith.constant dense<0.000000e+00> : vector<16x128xf32>
    %7 = tpu.matmul %3, %6, %cst_7 {dimension_numbers = #tpu.dot_dimension_numbers<[1], [0], [0], [1], [0, 0, 1, 1], [], []>} : vector<16x10xbf16>, vector<10x128xbf16>, vector<16x128xf32> -> vector<16x128xf32>
    %8 = arith.addf %5, %7 : vector<16x128xf32>
    %c0_8 = arith.constant 0 : index
    %c0_9 = arith.constant 0 : index
    %9 = vector.load %arg5[%c0_8, %c0_9] : memref<1x128xf32, #tpu.memory_space<vmem>>, vector<1x128xf32>
    %10 = vector.broadcast %9 : vector<1x128xf32> to vector<16x128xf32>
    %11 = arith.addf %8, %10 : vector<16x128xf32>
    %cst_10 = arith.constant 0.000000e+00 : f32
    %12 = vector.broadcast %cst_10 : f32 to vector<16x128xf32>
    %13 = arith.maximumf %11, %12 : vector<16x128xf32>
    %14 = arith.truncf %13 : vector<16x128xf32> to vector<16x128xbf16>
    %c0_11 = arith.constant 0 : index
    %c0_12 = arith.constant 0 : index
    %15 = vector.load %arg6[%c0_11, %c0_12] : memref<128x64xbf16, #tpu.memory_space<vmem>>, vector<128x64xbf16>
    %cst_13 = arith.constant dense<0.000000e+00> : vector<16x64xf32>
    %16 = tpu.matmul %14, %15, %cst_13 {dimension_numbers = #tpu.dot_dimension_numbers<[1], [0], [0], [1], [0, 0, 1, 1], [], []>} : vector<16x128xbf16>, vector<128x64xbf16>, vector<16x64xf32> -> vector<16x64xf32>
    %c0_14 = arith.constant 0 : index
    %c0_15 = arith.constant 0 : index
    %17 = vector.load %arg7[%c0_14, %c0_15] : memref<1x64xf32, #tpu.memory_space<vmem>>, vector<1x64xf32>
    %18 = vector.broadcast %17 : vector<1x64xf32> to vector<16x64xf32>
    %19 = arith.addf %16, %18 : vector<16x64xf32>
    %20 = arith.negf %19 : vector<16x64xf32>
    %21 = math.exp %20 : vector<16x64xf32>
    %cst_16 = arith.constant 1.000000e+00 : f32
    %22 = vector.broadcast %cst_16 : f32 to vector<16x64xf32>
    %23 = arith.addf %22, %21 : vector<16x64xf32>
    %24 = arith.divf %22, %23 : vector<16x64xf32>
    %c0_17 = arith.constant 0 : index
    %c0_18 = arith.constant 0 : index
    %25 = vector.load %arg8[%c0_17, %c0_18] : memref<16x64xf32, #tpu.memory_space<vmem>>, vector<16x64xf32>
    tpu.vector_store %arg8[%c0_17, %c0_18], %24 {strides = array<i32>} : memref<16x64xf32, #tpu.memory_space<vmem>>, vector<16x64xf32>,
    return
  }
  func.func @transform_0(%arg0: i32) -> (i32, i32) {
    %c0_i32 = arith.constant 0 : i32
    %c0_i32_0 = arith.constant 0 : i32
    return %arg0, %c0_i32 : i32, i32
  }
  func.func @transform_1(%arg0: i32) -> (i32, i32) {
    %c0_i32 = arith.constant 0 : i32
    %c0_i32_0 = arith.constant 0 : i32
    return %arg0, %c0_i32 : i32, i32
  }
  func.func @transform_2(%arg0: i32) -> (i32, i32) {
    %c0_i32 = arith.constant 0 : i32
    %c0_i32_0 = arith.constant 0 : i32
    %c0_i32_1 = arith.constant 0 : i32
    return %c0_i32, %c0_i32_0 : i32, i32
  }
  func.func @transform_3(%arg0: i32) -> (i32, i32) {
    %c0_i32 = arith.constant 0 : i32
    %c0_i32_0 = arith.constant 0 : i32
    %c0_i32_1 = arith.constant 0 : i32
    return %c0_i32, %c0_i32_0 : i32, i32
  }
  func.func @transform_4(%arg0: i32) -> (i32, i32) {
    %c0_i32 = arith.constant 0 : i32
    %c0_i32_0 = arith.constant 0 : i32
    %c0_i32_1 = arith.constant 0 : i32
    return %c0_i32, %c0_i32_0 : i32, i32
  }
  func.func @transform_5(%arg0: i32) -> (i32, i32) {
    %c0_i32 = arith.constant 0 : i32
    %c0_i32_0 = arith.constant 0 : i32
    %c0_i32_1 = arith.constant 0 : i32
    return %c0_i32, %c0_i32_0 : i32, i32
  }
  func.func @transform_6(%arg0: i32) -> (i32, i32) {
    %c0_i32 = arith.constant 0 : i32
    %c0_i32_0 = arith.constant 0 : i32
    %c0_i32_1 = arith.constant 0 : i32
    return %c0_i32, %c0_i32_0 : i32, i32
  }
  func.func @transform_7(%arg0: i32) -> (i32, i32) {
    %c0_i32 = arith.constant 0 : i32
    %c0_i32_0 = arith.constant 0 : i32
    return %arg0, %c0_i32 : i32, i32
  }
}

</mosaic_0001>

<llo_original>
// kernel: tpu_custom_call.1
$region0: #{tpu_custom_call.1}
  #allocation0 [shape = 'u32[]', space=smem, size = 0x4, offset = 0x4, fixed_abs, tag = 'smem constant byte address 0x4 - core index']
  #allocation1 [shape = 'u32[144,128]{1,0:T(1,128)}', space=vmem, size = 0x12000, scoped, tag = 'internal scratch']
  %s0 = inlined_call_operand.vmem [shape: f32[8,32], index: 0, kind: input, shape index: {}]
  %s1 = inlined_call_operand.vmem [shape: f32[8,10], index: 1, kind: input, shape index: {}]
  %s2 = inlined_call_operand.vmem [shape: bf16[32,128], index: 2, kind: input, shape index: {}]
  %s3 = inlined_call_operand.vmem [shape: bf16[10,128], index: 3, kind: input, shape index: {}]
  %s4 = inlined_call_operand.vmem [shape: f32[1,128], index: 4, kind: input, shape index: {}]
  %s5 = inlined_call_operand.vmem [shape: bf16[128,64], index: 5, kind: input, shape index: {}]
  %s6 = inlined_call_operand.vmem [shape: f32[1,64], index: 6, kind: input, shape index: {}]
  %s7 = inlined_call_operand.hbm [shape: f32[8,64], index: 7, kind: output, shape index: {}]
  %s8 = sld [smem:[#allocation0]]
  $region38: #{tpu_custom_call.1} parent=0
    _
  %s10 = ssub.s32 1, %s8
  %s11 = scalar_select 0, %s10, %s8
  $region1: #{tpu_custom_call.1} parent=0
    #allocation2 [shape = 'u8[8192]{0}', space=vmem, size = 0x2000, scoped, tag = 'output window, operand 0, single buffered']
    #allocation3 [shape = 's32[1]{0}', space=sflag, size = 0x4, scoped, tag = 'scoped memory for tpu_custom_call.1']
    %12 = vsyncpa [#allocation3], 0
    // Predicated region
    $region2: #{tpu_custom_call.1} parent=1 // pred_check
      _
    $region3: #{tpu_custom_call.1} parent=1 // pred_check_branch
      %14 = sbr.rel (0) target = $region5
    $region4: #{tpu_custom_call.1} parent=1 // pred_region
      _
    $region5: #{tpu_custom_call.1} parent=1 // pred_fallthru
      _
    // Predicated region
    $region6: #{tpu_custom_call.1} parent=1 // pred_check
      _
    $region7: #{tpu_custom_call.1} parent=1 // pred_check_branch
      %16 = sbr.rel (0) target = $region9
    $region8: #{tpu_custom_call.1} parent=1 // pred_region
      _
    $region9: #{tpu_custom_call.1} parent=1 // pred_fallthru
      _
    // Predicated region
    $region10: #{tpu_custom_call.1} parent=1 // pred_check
      _
    $region11: #{tpu_custom_call.1} parent=1 // pred_check_branch
      %18 = sbr.rel (0) target = $region13
    $region12: #{tpu_custom_call.1} parent=1 // pred_region
      _
    $region13: #{tpu_custom_call.1} parent=1 // pred_fallthru
      _
    // Predicated region
    $region14: #{tpu_custom_call.1} parent=1 // pred_check
      _
    $region15: #{tpu_custom_call.1} parent=1 // pred_check_branch
      %20 = sbr.rel (0) target = $region17
    $region16: #{tpu_custom_call.1} parent=1 // pred_region
      _
    $region17: #{tpu_custom_call.1} parent=1 // pred_fallthru
      _
    // Predicated region
    $region18: #{tpu_custom_call.1} parent=1 // pred_check
      _
    $region19: #{tpu_custom_call.1} parent=1 // pred_check_branch
      %22 = sbr.rel (0) target = $region21
    $region20: #{tpu_custom_call.1} parent=1 // pred_region
      _
    $region21: #{tpu_custom_call.1} parent=1 // pred_fallthru
      _
    // Predicated region
    $region22: #{tpu_custom_call.1} parent=1 // pred_check
      _
    $region23: #{tpu_custom_call.1} parent=1 // pred_check_branch
      %24 = sbr.rel (0) target = $region25
    $region24: #{tpu_custom_call.1} parent=1 // pred_region
      _
    $region25: #{tpu_custom_call.1} parent=1 // pred_fallthru
      _
    // Predicated region
    $region26: #{tpu_custom_call.1} parent=1 // pred_check
      _
    $region27: #{tpu_custom_call.1} parent=1 // pred_check_branch
      %26 = sbr.rel (0) target = $region29
    $region28: #{tpu_custom_call.1} parent=1 // pred_region
      _
    $region29: #{tpu_custom_call.1} parent=1 // pred_fallthru
      _
    %v28 = vld [vmem:[%s0] sm:$0xff]
    %v29 = vld [vmem:[%s0 + $0x8] sm:$0xff]
    %v30 = vpack.c.bf16 %v29, %v28
    %v31 = vld [vmem:[%s1] sm:$0xff]
    %v32 = vld [vmem:[%s1 + $0x8] sm:$0xff]
    %v33 = vpack.c.bf16 %v32, %v31
    %v34 = vld [vmem:[%s2] sm:$0xf]
    %v35 = vld [vmem:[%s2 + $0x4] sm:$0xf]
    %v36 = vld [vmem:[%s2 + $0x8] sm:$0xf]
    %v37 = vld [vmem:[%s2 + $0xc] sm:$0xf]
    %v38 = vld [vmem:[%s3] sm:$0xf]
    %v39 = vld [vmem:[%s3 + $0x4] sm:$0x1]
    %v42 = vunpack.c.l.b16 %v38
    %v43 = vunpack.c.l.b16 %v39
    %v44 = vpack.c.b16 %v43, %v42
    %vm45 = vcmask 80896
    %v47 = vsel %vm45, %v33, 0
    %vm49 = vcmask 1044480
    %v51 = vsel %vm49, %v44, 0
    %53 = vmatprep.subr.bf16.mxu0 0
    %54 = vmatpush1.bf16.msra.mxu0 %v51
    %55 = vmatprep.subr.bf16.mxu0 0
    %56 = vmatpush1.bf16.msra.mxu0 0
    %57 = vmatprep.subr.bf16.mxu0 0
    %58 = vmatpush1.bf16.msra.mxu0 0
    %59 = vmatprep.subr.bf16.mxu0 0
    %60 = vmatpush1.bf16.msra.mxu0 0
    %61 = vmatprep.subr.bf16.mxu0 0
    %62 = vmatpush1.bf16.msra.mxu0 0
    %63 = vmatprep.subr.bf16.mxu0 0
    %64 = vmatpush1.bf16.msra.mxu0 0
    %65 = vmatprep.subr.bf16.mxu0 0
    %66 = vmatpush1.bf16.msra.mxu0 0
    %67 = vmatprep.subr.bf16.mxu0 0
    %68 = vmatpush1.bf16.msra.mxu0 0
    %69 = vmatprep.subr.bf16.mxu0 0
    %70 = vmatpush1.bf16.msra.mxu0 0
    %71 = vmatprep.subr.bf16.mxu0 0
    %72 = vmatpush1.bf16.msra.mxu0 0
    %73 = vmatprep.subr.bf16.mxu0 0
    %74 = vmatpush1.bf16.msra.mxu0 0
    %75 = vmatprep.subr.bf16.mxu0 0
    %76 = vmatpush1.bf16.msra.mxu0 0
    %77 = vmatprep.subr.bf16.mxu0 0
    %78 = vmatpush1.bf16.msra.mxu0 0
    %79 = vmatprep.subr.bf16.mxu0 0
    %80 = vmatpush1.bf16.msra.mxu0 0
    %81 = vmatprep.subr.bf16.mxu0 0
    %82 = vmatpush1.bf16.msra.mxu0 0
    %83 = vmatprep.subr.bf16.mxu0 0
    %84 = vmatpush1.bf16.msra.mxu0 0
    %85 = vmatprep.mubr.bf16.mxu0 0
    %86 = vmatmul.mubr.bf16.gmra.mrb[0].mxu0 %v47
    %v87 = vpop.f32.mrb[0].mxu0
    %v88 = vadd.f32 0.0, %v87
    %v89 = vpop.f32.mrb[0].mxu0
    %v90 = vpop.f32.mrb[0].mxu0
    %v91 = vadd.f32 0.0, %v90
    %v92 = vpop.f32.mrb[0].mxu0
    %93 = vdwg.mxu0
    %v98 = vunpack.c.l.b16 %v34
    %v99 = vunpack.c.l.b16 %v35
    %v100 = vunpack.c.l.b16 %v36
    %v101 = vunpack.c.l.b16 %v37
    %v102 = vpack.c.b16 %v99, %v98
    %v103 = vpack.c.b16 %v101, %v100
    %vm106 = vcmask 261120
    %v108 = vsel %vm106, %v30, 0
    %110 = vmatprep.subr.bf16.mxu0 0
    %111 = vmatpush1.bf16.msra.mxu0 %v102
    %112 = vmatprep.subr.bf16.mxu0 0
    %113 = vmatpush1.bf16.msra.mxu0 %v103
    %114 = vmatprep.subr.bf16.mxu0 0
    %115 = vmatpush1.bf16.msra.mxu0 0
    %116 = vmatprep.subr.bf16.mxu0 0
    %117 = vmatpush1.bf16.msra.mxu0 0
    %118 = vmatprep.subr.bf16.mxu0 0
    %119 = vmatpush1.bf16.msra.mxu0 0
    %120 = vmatprep.subr.bf16.mxu0 0
    %121 = vmatpush1.bf16.msra.mxu0 0
    %122 = vmatprep.subr.bf16.mxu0 0
    %123 = vmatpush1.bf16.msra.mxu0 0
    %124 = vmatprep.subr.bf16.mxu0 0
    %125 = vmatpush1.bf16.msra.mxu0 0
    %126 = vmatprep.subr.bf16.mxu0 0
    %127 = vmatpush1.bf16.msra.mxu0 0
    %128 = vmatprep.subr.bf16.mxu0 0
    %129 = vmatpush1.bf16.msra.mxu0 0
    %130 = vmatprep.subr.bf16.mxu0 0
    %131 = vmatpush1.bf16.msra.mxu0 0
    %132 = vmatprep.subr.bf16.mxu0 0
    %133 = vmatpush1.bf16.msra.mxu0 0
    %134 = vmatprep.subr.bf16.mxu0 0
    %135 = vmatpush1.bf16.msra.mxu0 0
    %136 = vmatprep.subr.bf16.mxu0 0
    %137 = vmatpush1.bf16.msra.mxu0 0
    %138 = vmatprep.subr.bf16.mxu0 0
    %139 = vmatpush1.bf16.msra.mxu0 0
    %140 = vmatprep.subr.bf16.mxu0 0
    %141 = vmatpush1.bf16.msra.mxu0 0
    %142 = vmatprep.mubr.bf16.mxu0 0
    %143 = vmatmul.mubr.bf16.gmra.mrb[0].mxu0 %v108
    %v144 = vpop.f32.mrb[0].mxu0
    %v145 = vadd.f32 %v88, %v144
    %v146 = vpop.f32.mrb[0].mxu0
    %v147 = vpop.f32.mrb[0].mxu0
    %v148 = vadd.f32 %v91, %v147
    %v149 = vpop.f32.mrb[0].mxu0
    %150 = vdwg.mxu0
    %v151 = vld [vmem:[%s4] sm:$0x1]
    %v153 = vlaneseq
    %v154 = vshrl.u32 %v153, 7
    %v155 = vsub.s32 0, %v154
    %v156 = vrot.slane %v151, %v155
    %v158 = vadd.f32 %v145, %v156
    %v159 = vadd.f32 %v148, %v156
    %v160 = vmax.f32 %v158, 0.0
    %v161 = vmax.f32 %v159, 0.0
    %v162 = vpack.c.bf16 %v161, %v160
    %v163 = vld [vmem:[%s5] sm:$0xf]
    %v164 = vld [vmem:[%s5 + $0x4] sm:$0xf]
    %v165 = vld [vmem:[%s5 + $0x8] sm:$0xf]
    %v166 = vld [vmem:[%s5 + $0xc] sm:$0xf]
    %v167 = vld [vmem:[%s5 + $0x10] sm:$0xf]
    %v168 = vld [vmem:[%s5 + $0x14] sm:$0xf]
    %v169 = vld [vmem:[%s5 + $0x18] sm:$0xf]
    %v170 = vld [vmem:[%s5 + $0x1c] sm:$0xf]
    %v171 = vld [vmem:[%s5 + $0x20] sm:$0xf]
    %v172 = vld [vmem:[%s5 + $0x24] sm:$0xf]
    %v173 = vld [vmem:[%s5 + $0x28] sm:$0xf]
    %v174 = vld [vmem:[%s5 + $0x2c] sm:$0xf]
    %v175 = vld [vmem:[%s5 + $0x30] sm:$0xf]
    %v176 = vld [vmem:[%s5 + $0x34] sm:$0xf]
    %v177 = vld [vmem:[%s5 + $0x38] sm:$0xf]
    %v178 = vld [vmem:[%s5 + $0x3c] sm:$0xf]
    %v179 = vld [vmem:[%s6] sm:$0x1]
    %v181 = vlaneseq
    %v182 = vshrl.u32 %v181, 7
    %v183 = vsub.s32 0, %v182
    %v184 = vrot.slane %v179, %v183
    %v202 = vunpack.c.l.b16 %v163
    %v203 = vunpack.c.l.b16 %v164
    %v204 = vunpack.c.l.b16 %v165
    %v205 = vunpack.c.l.b16 %v166
    %v206 = vunpack.c.l.b16 %v167
    %v207 = vunpack.c.l.b16 %v168
    %v208 = vunpack.c.l.b16 %v169
    %v209 = vunpack.c.l.b16 %v170
    %v210 = vunpack.c.l.b16 %v171
    %v211 = vunpack.c.l.b16 %v172
    %v212 = vunpack.c.l.b16 %v173
    %v213 = vunpack.c.l.b16 %v174
    %v214 = vunpack.c.l.b16 %v175
    %v215 = vunpack.c.l.b16 %v176
    %v216 = vunpack.c.l.b16 %v177
    %v217 = vunpack.c.l.b16 %v178
    %v218 = vpack.c.b16 %v203, %v202
    %v219 = vpack.c.b16 %v205, %v204
    %v220 = vpack.c.b16 %v207, %v206
    %v221 = vpack.c.b16 %v209, %v208
    %v222 = vpack.c.b16 %v211, %v210
    %v223 = vpack.c.b16 %v213, %v212
    %v224 = vpack.c.b16 %v215, %v214
    %v225 = vpack.c.b16 %v217, %v216
    %234 = vmatprep.subr.bf16.mxu0 0
    %235 = vmatpush1.bf16.msra.mxu0 %v218
    %236 = vmatprep.subr.bf16.mxu0 0
    %237 = vmatpush1.bf16.msra.mxu0 %v219
    %238 = vmatprep.subr.bf16.mxu0 0
    %239 = vmatpush1.bf16.msra.mxu0 %v220
    %240 = vmatprep.subr.bf16.mxu0 0
    %241 = vmatpush1.bf16.msra.mxu0 %v221
    %242 = vmatprep.subr.bf16.mxu0 0
    %243 = vmatpush1.bf16.msra.mxu0 %v222
    %244 = vmatprep.subr.bf16.mxu0 0
    %245 = vmatpush1.bf16.msra.mxu0 %v223
    %246 = vmatprep.subr.bf16.mxu0 0
    %247 = vmatpush1.bf16.msra.mxu0 %v224
    %248 = vmatprep.subr.bf16.mxu0 0
    %249 = vmatpush1.bf16.msra.mxu0 %v225
    %250 = vmatprep.subr.bf16.mxu0 0
    %251 = vmatpush1.bf16.msra.mxu0 0
    %252 = vmatprep.subr.bf16.mxu0 0
    %253 = vmatpush1.bf16.msra.mxu0 0
    %254 = vmatprep.subr.bf16.mxu0 0
    %255 = vmatpush1.bf16.msra.mxu0 0
    %256 = vmatprep.subr.bf16.mxu0 0
    %257 = vmatpush1.bf16.msra.mxu0 0
    %258 = vmatprep.subr.bf16.mxu0 0
    %259 = vmatpush1.bf16.msra.mxu0 0
    %260 = vmatprep.subr.bf16.mxu0 0
    %261 = vmatpush1.bf16.msra.mxu0 0
    %262 = vmatprep.subr.bf16.mxu0 0
    %263 = vmatpush1.bf16.msra.mxu0 0
    %264 = vmatprep.subr.bf16.mxu0 0
    %265 = vmatpush1.bf16.msra.mxu0 0
    %266 = vmatprep.mubr.bf16.mxu0 0
    %267 = vmatmul.mubr.bf16.gmra.mrb[0].mxu0 %v162
    %v268 = vpop.f32.mrb[0].mxu0
    %v269 = vadd.f32 %v184, %v268
    %v270 = vpop.f32.mrb[0].mxu0
    %v271 = vpop.f32.mrb[0].mxu0
    %v272 = vadd.f32 %v184, %v271
    %v273 = vpop.f32.mrb[0].mxu0
    %274 = vdwg.mxu0
    %v275 = vxor.u32 %v269, 2147483648
    %v276 = vxor.u32 %v272, 2147483648
    %v277 = vmul.f32 %v275, 1.442695
    %v278 = vpow.pop %v277
    %v279 = vmul.f32 %v276, 1.442695
    %v280 = vpow.pop %v279
    %v281 = vadd.f32 %v278, 1.0
    %v282 = vadd.f32 %v280, 1.0
    %v283 = vrcp.pop %v281
    %v284 = vmul.f32 1.0, %v283
    %v285 = vrcp.pop %v282
    %v286 = vmul.f32 1.0, %v285
    %vm287 = vcmask 523264
    %288 = vst.msk [vmem:[#allocation2] sm:$0xff] %vm287, %v284
    %289 = vst.msk [vmem:[#allocation2 + $0x8] sm:$0xff] %vm287, %v286
    // Predicated region
    $region30: #{tpu_custom_call.1} parent=1 // pred_check
      _
    $region31: #{tpu_custom_call.1} parent=1 // pred_check_branch
      %291 = sbr.rel (0) target = $region33
    $region32: #{tpu_custom_call.1} parent=1 // pred_region
      %s293 = ssub.s32 256, 128
      %294 = vsyncadd [#allocation3], %s293
      %s295 = sshll.u32 [#allocation2], 4
      %s296 = int_to_ptr.vmem [resolvable:$true] %s295
      %301 = dma.vmem_to_hbm [thread:$0]  %s296, 128, %s7, [#allocation3], 128, 128, 8
    $region33: #{tpu_custom_call.1} parent=1 // pred_fallthru
      _
    // Predicated region
    $region34: #{tpu_custom_call.1} parent=1 // pred_check
      _
    $region35: #{tpu_custom_call.1} parent=1 // pred_check_branch
      %303 = sbr.rel (0) target = $region37
    $region36: #{tpu_custom_call.1} parent=1 // pred_region
      %304 = dma.done [#allocation3], 256
    $region37: #{tpu_custom_call.1} parent=1 // pred_fallthru
      _
    %305 = vsyncpa [#allocation3], 1

</llo_original>
